<compile_context>
chip_gen: v6e
topology: v6e:2x2x1
jax: 0.10.0
libtpu: 0.0.40
codegen_flags: <defaults>
</compile_context>

<pallas_src>
import math

import jax
import jax.numpy as jnp
from jax.experimental import pallas as pl
from jax.experimental.pallas import tpu as pltpu


def _generator_kernel(x_ref, w1_ref, b1_ref, w2_ref, b2_ref, out_ref):
    # hidden = relu(x @ W1 + b1)   (MXU in bf16, accumulate f32, VPU work in f32)
    h = jnp.dot(x_ref[...], w1_ref[...], preferred_element_type=jnp.float32)
    h = jnp.maximum(h + b1_ref[...], 0.0)           # [TILE_B, H_p] broadcast over [1, H_p]
    # out = tanh(h @ W2 + b2) — deliberate downcast of the ReLU output to the weight
    # (MXU) dtype; accumulation stays f32.
    y = jnp.dot(h.astype(w2_ref.dtype), w2_ref[...],
                preferred_element_type=jnp.float32)
    out_ref[...] = jnp.tanh(y + b2_ref[...]).astype(out_ref.dtype)


def _round_up(n, m):
    return ((n + m - 1) // m) * m


def generator_forward(x, w1, b1, w2, b2, *, tile_b=128, mxu_dtype=jnp.bfloat16):
    """Fused Linear->ReLU->Linear->Tanh on TPU.

    x:  [B, input_size]
    w1: [input_size, hidden_size]     b1: [1, hidden_size]
    w2: [hidden_size, output_size]    b2: [1, output_size]
    returns [B, output_size] in x.dtype

    Weights are stored as [in_features, out_features] (transposed vs. PyTorch) so the
    kernel does plain x @ W on the MXU.
    """
    B, in_size = x.shape
    hidden = w1.shape[1]
    out_size = w2.shape[1]
    out_dtype = x.dtype

    # ---- lane-dense padding -------------------------------------------------
    in_p = _round_up(in_size, 128)
    hid_p = _round_up(hidden, 128)
    out_p = _round_up(out_size, 128)
    tile_b = min(tile_b, _round_up(B, 8))      # keep tile a multiple of 8 sublanes
    b_p = _round_up(B, tile_b)
    grid_b = b_p // tile_b

    x_p = jnp.zeros((b_p, in_p), mxu_dtype).at[:B, :in_size].set(x.astype(mxu_dtype))
    w1_p = jnp.zeros((in_p, hid_p), mxu_dtype).at[:in_size, :hidden].set(w1.astype(mxu_dtype))
    b1_p = jnp.zeros((1, hid_p), jnp.float32).at[:, :hidden].set(b1.astype(jnp.float32))
    w2_p = jnp.zeros((hid_p, out_p), mxu_dtype).at[:hidden, :out_size].set(w2.astype(mxu_dtype))
    b2_p = jnp.zeros((1, out_p), jnp.float32).at[:, :out_size].set(b2.astype(jnp.float32))

    # ---- explicit VMEM budget (weights + double-buffered batch tiles + live h) ----
    # NOTE: for very large hidden sizes on v7x (64 MiB VMEM) the weights should instead
    # be K-tiled over the hidden dim with an f32 accumulator; not needed at these sizes.
    mxu_itemsize = jnp.dtype(mxu_dtype).itemsize
    weight_bytes = (in_p * hid_p + hid_p * out_p) * mxu_itemsize + (hid_p + out_p) * 4
    tile_io_bytes = 2 * (tile_b * in_p * mxu_itemsize + tile_b * out_p * 4)  # double-buffered
    live_h_bytes = tile_b * hid_p * 4
    vmem_limit = min(64 * 1024 * 1024,
                     2 * (weight_bytes + tile_io_bytes + live_h_bytes) + (4 << 20))

    cost = pl.CostEstimate(
        flops=2 * b_p * (in_p * hid_p + hid_p * out_p),
        transcendentals=b_p * out_p,
        bytes_accessed=(x_p.size * mxu_itemsize
                        + w1_p.size * mxu_itemsize + w2_p.size * mxu_itemsize
                        + b1_p.size * 4 + b2_p.size * 4
                        + b_p * out_p * 4),
    )

    out_p_arr = pl.pallas_call(
        _generator_kernel,
        out_shape=jax.ShapeDtypeStruct((b_p, out_p), out_dtype),
        grid_spec=pltpu.PrefetchScalarGridSpec(
            num_scalar_prefetch=0,
            grid=(grid_b,),
            in_specs=[
                pl.BlockSpec((tile_b, in_p), lambda i: (i, 0)),   # batch-tiled activations
                pl.BlockSpec(w1_p.shape, lambda i: (0, 0)),       # weights stay resident
                pl.BlockSpec(b1_p.shape, lambda i: (0, 0)),
                pl.BlockSpec(w2_p.shape, lambda i: (0, 0)),
                pl.BlockSpec(b2_p.shape, lambda i: (0, 0)),
            ],
            out_specs=pl.BlockSpec((tile_b, out_p), lambda i: (i, 0)),
        ),
        compiler_params=pltpu.CompilerParams(
            dimension_semantics=("parallel",),       # shard batch tiles across TCs (v7x)
            vmem_limit_bytes=int(vmem_limit),
        ),
        cost_estimate=cost,
    )(x_p, w1_p, b1_p, w2_p, b2_p)

    return out_p_arr[:B, :out_size]


def init_generator_params(key, input_size, hidden_size, output_size,
                          dtype=jnp.float32):
    """Deterministic init mirroring nn.Linear's U(-1/sqrt(fan_in), 1/sqrt(fan_in))."""
    k1, k2, k3, k4 = jax.random.split(key, 4)
    bound1 = 1.0 / math.sqrt(input_size)
    bound2 = 1.0 / math.sqrt(hidden_size)
    w1 = jax.random.uniform(k1, (input_size, hidden_size), dtype,
                            minval=-bound1, maxval=bound1)
    b1 = jax.random.uniform(k2, (1, hidden_size), dtype,
                            minval=-bound1, maxval=bound1)
    w2 = jax.random.uniform(k3, (hidden_size, output_size), dtype,
                            minval=-bound2, maxval=bound2)
    b2 = jax.random.uniform(k4, (1, output_size), dtype,
                            minval=-bound2, maxval=bound2)
    return w1, b1, w2, b2


def reference_forward(x, w1, b1, w2, b2, mxu_dtype=jnp.float32):
    """Pure-JAX reference. mxu_dtype mirrors the kernel's matmul input precision."""
    h = jnp.dot(x.astype(mxu_dtype), w1.astype(mxu_dtype),
                preferred_element_type=jnp.float32) + b1.astype(jnp.float32)
    h = jnp.maximum(h, 0.0)
    y = jnp.dot(h.astype(mxu_dtype), w2.astype(mxu_dtype),
                preferred_element_type=jnp.float32) + b2.astype(jnp.float32)
    return jnp.tanh(y)


if __name__ == "__main__":
    # Small shapes consistent with Generator(input_size, hidden_size, output_size).
    # batch=256 with TILE_B=128 exercises a real 2-step pipelined / parallel grid.
    batch, input_size, hidden_size, output_size = 256, 16, 32, 16

    key = jax.random.PRNGKey(0)
    kx, kp = jax.random.split(key)
    x = jax.random.normal(kx, (batch, input_size), dtype=jnp.float32)
    w1, b1, w2, b2 = init_generator_params(kp, input_size, hidden_size, output_size)

    out = jax.block_until_ready(generator_forward(x, w1, b1, w2, b2, tile_b=128))
    assert out.shape == (batch, output_size)

    # Tight check vs. a reference that mirrors the kernel's bf16-matmul / f32-accumulate
    # precision, plus a sanity bound vs. the full-f32 reference.
    ref_bf16 = reference_forward(x, w1, b1, w2, b2, mxu_dtype=jnp.bfloat16)
    ref_f32 = reference_forward(x, w1, b1, w2, b2, mxu_dtype=jnp.float32)
    assert jnp.allclose(out, ref_bf16, atol=1e-3, rtol=1e-3), \
        float(jnp.max(jnp.abs(out - ref_bf16)))
    assert float(jnp.max(jnp.abs(out - ref_f32))) < 0.1

    print("KERNEL_OK")
</pallas_src>

<mosaic_0001>
module attributes {stable_mosaic.version = 11 : i64} {
  func.func @_generator_kernel(%arg0: i32, %arg1: memref<128x128xbf16, #tpu.memory_space<vmem>>, %arg2: memref<128x128xbf16, #tpu.memory_space<vmem>>, %arg3: memref<1x128xf32, #tpu.memory_space<vmem>>, %arg4: memref<128x128xbf16, #tpu.memory_space<vmem>>, %arg5: memref<1x128xf32, #tpu.memory_space<vmem>>, %arg6: memref<128x128xf32, #tpu.memory_space<vmem>>) attributes {dimension_semantics = [#tpu.dimension_semantics<parallel>], iteration_bounds = array<i64: 2>, scalar_prefetch = 0 : i64, scratch_operands = 0 : i64, tpu.core_type = #tpu.core_type<tc>, window_params = [{transform_indices = @transform_0, window_bounds = array<i64: 128, 128>}, {pipeline_mode = #tpu.pipeline_mode<synchronous>, transform_indices = @transform_1, window_bounds = array<i64: 128, 128>}, {pipeline_mode = #tpu.pipeline_mode<synchronous>, transform_indices = @transform_2, window_bounds = array<i64: 1, 128>}, {pipeline_mode = #tpu.pipeline_mode<synchronous>, transform_indices = @transform_3, window_bounds = array<i64: 128, 128>}, {pipeline_mode = #tpu.pipeline_mode<synchronous>, transform_indices = @transform_4, window_bounds = array<i64: 1, 128>}, {transform_indices = @transform_5, window_bounds = array<i64: 128, 128>}]} {
    %c0 = arith.constant 0 : index
    %c0_0 = arith.constant 0 : index
    %0 = vector.load %arg1[%c0, %c0_0] : memref<128x128xbf16, #tpu.memory_space<vmem>>, vector<128x128xbf16>
    %c0_1 = arith.constant 0 : index
    %c0_2 = arith.constant 0 : index
    %1 = vector.load %arg2[%c0_1, %c0_2] : memref<128x128xbf16, #tpu.memory_space<vmem>>, vector<128x128xbf16>
    %cst = arith.constant dense<0.000000e+00> : vector<128x128xf32>
    %2 = tpu.matmul %0, %1, %cst {dimension_numbers = #tpu.dot_dimension_numbers<[1], [0], [0], [1], [0, 0, 1, 1], [], []>} : vector<128x128xbf16>, vector<128x128xbf16>, vector<128x128xf32> -> vector<128x128xf32>
    %c0_3 = arith.constant 0 : index
    %c0_4 = arith.constant 0 : index
    %3 = vector.load %arg3[%c0_3, %c0_4] : memref<1x128xf32, #tpu.memory_space<vmem>>, vector<1x128xf32>
    %4 = vector.broadcast %3 : vector<1x128xf32> to vector<128x128xf32>
    %5 = arith.addf %2, %4 : vector<128x128xf32>
    %cst_5 = arith.constant 0.000000e+00 : f32
    %6 = vector.broadcast %cst_5 : f32 to vector<128x128xf32>
    %7 = arith.maximumf %5, %6 : vector<128x128xf32>
    %8 = arith.truncf %7 : vector<128x128xf32> to vector<128x128xbf16>
    %c0_6 = arith.constant 0 : index
    %c0_7 = arith.constant 0 : index
    %9 = vector.load %arg4[%c0_6, %c0_7] : memref<128x128xbf16, #tpu.memory_space<vmem>>, vector<128x128xbf16>
    %cst_8 = arith.constant dense<0.000000e+00> : vector<128x128xf32>
    %10 = tpu.matmul %8, %9, %cst_8 {dimension_numbers = #tpu.dot_dimension_numbers<[1], [0], [0], [1], [0, 0, 1, 1], [], []>} : vector<128x128xbf16>, vector<128x128xbf16>, vector<128x128xf32> -> vector<128x128xf32>
    %c0_9 = arith.constant 0 : index
    %c0_10 = arith.constant 0 : index
    %11 = vector.load %arg5[%c0_9, %c0_10] : memref<1x128xf32, #tpu.memory_space<vmem>>, vector<1x128xf32>
    %12 = vector.broadcast %11 : vector<1x128xf32> to vector<128x128xf32>
    %13 = arith.addf %10, %12 : vector<128x128xf32>
    %14 = math.tanh %13 : vector<128x128xf32>
    %c0_11 = arith.constant 0 : index
    %c0_12 = arith.constant 0 : index
    %15 = vector.load %arg6[%c0_11, %c0_12] : memref<128x128xf32, #tpu.memory_space<vmem>>, vector<128x128xf32>
    tpu.vector_store %arg6[%c0_11, %c0_12], %14 {strides = array<i32>} : memref<128x128xf32, #tpu.memory_space<vmem>>, vector<128x128xf32>,
    return
  }
  func.func @transform_0(%arg0: i32) -> (i32, i32) {
    %c0_i32 = arith.constant 0 : i32
    %c0_i32_0 = arith.constant 0 : i32
    return %arg0, %c0_i32 : i32, i32
  }
  func.func @transform_1(%arg0: i32) -> (i32, i32) {
    %c0_i32 = arith.constant 0 : i32
    %c0_i32_0 = arith.constant 0 : i32
    %c0_i32_1 = arith.constant 0 : i32
    return %c0_i32, %c0_i32_0 : i32, i32
  }
  func.func @transform_2(%arg0: i32) -> (i32, i32) {
    %c0_i32 = arith.constant 0 : i32
    %c0_i32_0 = arith.constant 0 : i32
    %c0_i32_1 = arith.constant 0 : i32
    return %c0_i32, %c0_i32_0 : i32, i32
  }
  func.func @transform_3(%arg0: i32) -> (i32, i32) {
    %c0_i32 = arith.constant 0 : i32
    %c0_i32_0 = arith.constant 0 : i32
    %c0_i32_1 = arith.constant 0 : i32
    return %c0_i32, %c0_i32_0 : i32, i32
  }
  func.func @transform_4(%arg0: i32) -> (i32, i32) {
    %c0_i32 = arith.constant 0 : i32
    %c0_i32_0 = arith.constant 0 : i32
    %c0_i32_1 = arith.constant 0 : i32
    return %c0_i32, %c0_i32_0 : i32, i32
  }
  func.func @transform_5(%arg0: i32) -> (i32, i32) {
    %c0_i32 = arith.constant 0 : i32
    %c0_i32_0 = arith.constant 0 : i32
    return %arg0, %c0_i32 : i32, i32
  }
}

</mosaic_0001>

<llo_original>
// kernel: tpu_custom_call.1
$region0: #{tpu_custom_call.1}
  #allocation0 [shape = 'u32[]', space=smem, size = 0x4, offset = 0x4, fixed_abs, tag = 'smem constant byte address 0x4 - core index']
  #allocation1 [shape = 'u32[144,128]{1,0:T(1,128)}', space=vmem, size = 0x12000, scoped, tag = 'internal scratch']
  %s0 = inlined_call_operand.hbm [shape: bf16[256,128], index: 0, kind: input, shape index: {}]
  %s1 = inlined_call_operand.hbm [shape: bf16[128,128], index: 1, kind: input, shape index: {}]
  %s2 = inlined_call_operand.vmem [shape: f32[1,128], index: 2, kind: input, shape index: {}]
  %s3 = inlined_call_operand.hbm [shape: bf16[128,128], index: 3, kind: input, shape index: {}]
  %s4 = inlined_call_operand.vmem [shape: f32[1,128], index: 4, kind: input, shape index: {}]
  %s5 = inlined_call_operand.hbm [shape: f32[256,128], index: 5, kind: output, shape index: {}]
  %s6 = sld [smem:[#allocation0]]
  $region65: #{tpu_custom_call.1} parent=0
    _
  %s8 = ssub.s32 1, %s6
  %s9 = scalar_select 0, %s8, %s6
  $region1: #{tpu_custom_call.1} parent=0
    #allocation2 [shape = 'u8[65536]{0}', space=vmem, size = 0x10000, scoped, tag = 'input window, operand 0']
    #allocation3 [shape = 's32[2]{0}', space=sflag, size = 0x8, scoped, tag = 'scoped memory for tpu_custom_call.1']
    #allocation4 [shape = 's32[2]{0}', space=sflag, size = 0x8, scoped, tag = 'scoped memory for tpu_custom_call.1']
    #allocation5 [shape = 'u8[32768]{0}', space=vmem, size = 0x8000, scoped, tag = 'input window, operand 1, single buffered']
    #allocation6 [shape = 's32[1]{0}', space=sflag, size = 0x4, scoped, tag = 'scoped memory for tpu_custom_call.1']
    #allocation7 [shape = 'u8[32768]{0}', space=vmem, size = 0x8000, scoped, tag = 'input window, operand 3, single buffered']
    #allocation8 [shape = 'u8[131072]{0}', space=vmem, size = 0x20000, scoped, tag = 'output window, operand 0']
    %10 = vsyncpa [#allocation3], 0
    %s11 = scalar_lea.sflag [#allocation3], 1
    %12 = vsyncpa %s11, 0
    %13 = vsyncpa [#allocation6], 0
    %14 = vsyncpa [#allocation4], 0
    %s15 = scalar_lea.sflag [#allocation4], 1
    %16 = vsyncpa %s15, 0
    loop: start=0, step=1, limit=4
    $region2: #{tpu_custom_call.1} parent=1 // loop_pre_header
      _
    $region3: #{tpu_custom_call.1} parent=1 // loop_header
      %s18 = sphi 0, %s22
      %p19 = scmp.ge.s32.totalorder %s18, 4
      %s28 = sphi 0, %s30
      %s31 = sphi 0, %s28
      %s32 = sphi 0, %s31
      %s48 = sphi 0, %s32
      %s52 = sphi 0, %s52
      %s54 = sphi 0, %s52
      %s55 = sphi 0, %s54
      %s69 = sphi 0, %s55
      %s73 = sphi 0, %s73
      %s75 = sphi 0, %s73
      %s76 = sphi 0, %s75
      %s90 = sphi 0, %s76
      %s94 = sphi 0, %s94
      %s96 = sphi 0, %s94
      %s97 = sphi 0, %s96
      %s111 = sphi 0, %s97
      %s115 = sphi 0, %s115
      %s117 = sphi 0, %s115
      %s118 = sphi 0, %s117
      %s132 = sphi 0, %s118
      %s138 = sphi 0, %s140
      %s141 = sphi 0, %s138
      %s142 = sphi 0, %s141
      %s158 = sphi 0, %s142
    $region4: #{tpu_custom_call.1} parent=1 // loop_header_branch
      %21 = sbr.rel (%p19) target = $region8
    $region5: #{tpu_custom_call.1} parent=1 // loop_body
      %s23 = ssub.s32 %s18, 1
      %s24 = ssub.s32 %s18, 2
      %s25 = sadd.s32 %s18, 1
      %s26 = ssub.s32 %s18, %s25
      %p27 = scmp.eq.s32.totalorder %s26, 0
      %s29 = sadd.s32 %s28, 1
      %s30 = scalar_select %p27, %s28, %s29
      %p33 = pneg %p27
      %p34 = scmp.eq.s32.totalorder %s18, 1
      %p35 = por %p33, %p34
      %p36 = scmp.ne.s32.totalorder %s28, %s31
      %p37 = scmp.eq.s32.totalorder %s18, 0
      %p38 = por %p36, %p37
      %p39 = scmp.ne.s32.totalorder %s28, %s31
      %p40 = scmp.eq.s32.totalorder %s23, 1
      %p41 = por %p39, %p40
      %p42 = scmp.ne.s32.totalorder %s31, %s32
      %p43 = scmp.eq.s32.totalorder %s23, 0
      %p44 = por %p42, %p43
      %p45 = scmp.ne.s32.totalorder %s31, %s32
      %p46 = scmp.eq.s32.totalorder %s24, 1
      %p47 = por %p45, %p46
      %p49 = scmp.ne.s32.totalorder %s32, %s48
      %p50 = scmp.eq.s32.totalorder %s24, 0
      %p51 = por %p49, %p50
      %s53 = sadd.s32 %s52, 1
      %p56 = scmp.eq.s32.totalorder %s18, 1
      %p57 = scmp.ne.s32.totalorder %s52, %s54
      %p58 = scmp.eq.s32.totalorder %s18, 0
      %p59 = por %p57, %p58
      %p60 = scmp.ne.s32.totalorder %s52, %s54
      %p61 = scmp.eq.s32.totalorder %s23, 1
      %p62 = por %p60, %p61
      %p63 = scmp.ne.s32.totalorder %s54, %s55
      %p64 = scmp.eq.s32.totalorder %s23, 0
      %p65 = por %p63, %p64
      %p66 = scmp.ne.s32.totalorder %s54, %s55
      %p67 = scmp.eq.s32.totalorder %s24, 1
      %p68 = por %p66, %p67
      %p70 = scmp.ne.s32.totalorder %s55, %s69
      %p71 = scmp.eq.s32.totalorder %s24, 0
      %p72 = por %p70, %p71
      %s74 = sadd.s32 %s73, 1
      %p77 = scmp.eq.s32.totalorder %s18, 1
      %p78 = scmp.ne.s32.totalorder %s73, %s75
      %p79 = scmp.eq.s32.totalorder %s18, 0
      %p80 = por %p78, %p79
      %p81 = scmp.ne.s32.totalorder %s73, %s75
      %p82 = scmp.eq.s32.totalorder %s23, 1
      %p83 = por %p81, %p82
      %p84 = scmp.ne.s32.totalorder %s75, %s76
      %p85 = scmp.eq.s32.totalorder %s23, 0
      %p86 = por %p84, %p85
      %p87 = scmp.ne.s32.totalorder %s75, %s76
      %p88 = scmp.eq.s32.totalorder %s24, 1
      %p89 = por %p87, %p88
      %p91 = scmp.ne.s32.totalorder %s76, %s90
      %p92 = scmp.eq.s32.totalorder %s24, 0
      %p93 = por %p91, %p92
      %s95 = sadd.s32 %s94, 1
      %p98 = scmp.eq.s32.totalorder %s18, 1
      %p99 = scmp.ne.s32.totalorder %s94, %s96
      %p100 = scmp.eq.s32.totalorder %s18, 0
      %p101 = por %p99, %p100
      %p102 = scmp.ne.s32.totalorder %s94, %s96
      %p103 = scmp.eq.s32.totalorder %s23, 1
      %p104 = por %p102, %p103
      %p105 = scmp.ne.s32.totalorder %s96, %s97
      %p106 = scmp.eq.s32.totalorder %s23, 0
      %p107 = por %p105, %p106
      %p108 = scmp.ne.s32.totalorder %s96, %s97
      %p109 = scmp.eq.s32.totalorder %s24, 1
      %p110 = por %p108, %p109
      %p112 = scmp.ne.s32.totalorder %s97, %s111
      %p113 = scmp.eq.s32.totalorder %s24, 0
      %p114 = por %p112, %p113
      %s116 = sadd.s32 %s115, 1
      %p119 = scmp.eq.s32.totalorder %s18, 1
      %p120 = scmp.ne.s32.totalorder %s115, %s117
      %p121 = scmp.eq.s32.totalorder %s18, 0
      %p122 = por %p120, %p121
      %p123 = scmp.ne.s32.totalorder %s115, %s117
      %p124 = scmp.eq.s32.totalorder %s23, 1
      %p125 = por %p123, %p124
      %p126 = scmp.ne.s32.totalorder %s117, %s118
      %p127 = scmp.eq.s32.totalorder %s23, 0
      %p128 = por %p126, %p127
      %p129 = scmp.ne.s32.totalorder %s117, %s118
      %p130 = scmp.eq.s32.totalorder %s24, 1
      %p131 = por %p129, %p130
      %p133 = scmp.ne.s32.totalorder %s118, %s132
      %p134 = scmp.eq.s32.totalorder %s24, 0
      %p135 = por %p133, %p134
      %s136 = ssub.s32 %s18, %s25
      %p137 = scmp.eq.s32.totalorder %s136, 0
      %s139 = sadd.s32 %s138, 1
      %s140 = scalar_select %p137, %s138, %s139
      %p143 = pneg %p137
      %p144 = scmp.eq.s32.totalorder %s18, 1
      %p145 = por %p143, %p144
      %p146 = scmp.ne.s32.totalorder %s138, %s141
      %p147 = scmp.eq.s32.totalorder %s18, 0
      %p148 = por %p146, %p147
      %p149 = scmp.ne.s32.totalorder %s138, %s141
      %p150 = scmp.eq.s32.totalorder %s23, 1
      %p151 = por %p149, %p150
      %p152 = scmp.ne.s32.totalorder %s141, %s142
      %p153 = scmp.eq.s32.totalorder %s23, 0
      %p154 = por %p152, %p153
      %p155 = scmp.ne.s32.totalorder %s141, %s142
      %p156 = scmp.eq.s32.totalorder %s24, 1
      %p157 = por %p155, %p156
      %p159 = scmp.ne.s32.totalorder %s142, %s158
      %p160 = scmp.eq.s32.totalorder %s24, 0
      %p161 = por %p159, %p160
      %p162 = scmp.le.s32.totalorder 1, %s18
      %p163 = scmp.lt.s32.totalorder %s18, 3
      %p164 = pnand %p162, %p163
      %p165 = pneg %p164
      // Predicated region
      $region9: #{tpu_custom_call.1} parent=5 // pred_check
        _
      $region10: #{tpu_custom_call.1} parent=5 // pred_check_branch
        %167 = sbr.rel (%p164) target = $region12
      $region11: #{tpu_custom_call.1} parent=5 // pred_region
        %s168 = ssub.s32 %s18, 1
        // Predicated region
        $region13: #{tpu_custom_call.1} parent=11 // pred_check
          %p169 = pneg %p65
        $region14: #{tpu_custom_call.1} parent=11 // pred_check_branch
          %171 = sbr.rel (%p169) target = $region16
        $region15: #{tpu_custom_call.1} parent=11 // pred_region
          %s173 = ssub.s32 1024, 1024
          %174 = vsyncadd [#allocation6], %s173
          %s175 = sshll.u32 [#allocation5], 4
          %s176 = int_to_ptr.vmem [resolvable:$true] %s175
          %181 = dma.hbm_to_vmem [thread:$0]  %s1, 1024, %s176, [#allocation6], 64, 64, 4
        $region16: #{tpu_custom_call.1} parent=11 // pred_fallthru
          _
        // Predicated region
        $region17: #{tpu_custom_call.1} parent=11 // pred_check
          %p182 = pneg %p86
        $region18: #{tpu_custom_call.1} parent=11 // pred_check_branch
          %184 = sbr.rel (%p182) target = $region20
        $region19: #{tpu_custom_call.1} parent=11 // pred_region
          _
        $region20: #{tpu_custom_call.1} parent=11 // pred_fallthru
          _
        // Predicated region
        $region21: #{tpu_custom_call.1} parent=11 // pred_check
          %p185 = pneg %p107
        $region22: #{tpu_custom_call.1} parent=11 // pred_check_branch
          %187 = sbr.rel (%p185) target = $region24
        $region23: #{tpu_custom_call.1} parent=11 // pred_region
          %s189 = ssub.s32 1024, 1024
          %190 = vsyncadd [#allocation6], %s189
          %s191 = sshll.u32 [#allocation7], 4
          %s192 = int_to_ptr.vmem [resolvable:$true] %s191
          %197 = dma.hbm_to_vmem [thread:$0]  %s3, 1024, %s192, [#allocation6], 64, 64, 4
        $region24: #{tpu_custom_call.1} parent=11 // pred_fallthru
          _
        // Predicated region
        $region25: #{tpu_custom_call.1} parent=11 // pred_check
          %p198 = pneg %p128
        $region26: #{tpu_custom_call.1} parent=11 // pred_check_branch
          %200 = sbr.rel (%p198) target = $region28
        $region27: #{tpu_custom_call.1} parent=11 // pred_region
          _
        $region28: #{tpu_custom_call.1} parent=11 // pred_fallthru
          _
      $region12: #{tpu_custom_call.1} parent=5 // pred_fallthru
        _
      %p201 = scmp.lt.s32.totalorder %s18, 2
      // Predicated region
      $region29: #{tpu_custom_call.1} parent=5 // pred_check
        %p202 = pneg %p201
      $region30: #{tpu_custom_call.1} parent=5 // pred_check_branch
        %204 = sbr.rel (%p202) target = $region32
      $region31: #{tpu_custom_call.1} parent=5 // pred_region
        // Predicated region
        $region33: #{tpu_custom_call.1} parent=31 // pred_check
          %p205 = pneg %p38
        $region34: #{tpu_custom_call.1} parent=31 // pred_check_branch
          %207 = sbr.rel (%p205) target = $region36
        $region35: #{tpu_custom_call.1} parent=31 // pred_region
          %s208 = sand.u32 %s28, 1
          %s209 = scalar_lea.sflag [#allocation3], %s208
          %s210 = sand.u32 %s28, 1
          %s211 = smul.addr %s210, 64
          %s212 = scalar_lea.vmem [#allocation2], %s211
          %s213 = smul.u32 16, %s18
          %s215 = ssub.s32 1024, 1024
          %216 = vsyncadd %s209, %s215
          %s217 = smul.addr %s213, 64
          %s218 = scalar_lea.hbm %s0, %s217
          %s219 = sshll.u32 %s212, 4
          %s220 = int_to_ptr.vmem [resolvable:$true] %s219
          %225 = dma.hbm_to_vmem [thread:$0]  %s218, 1024, %s220, %s209, 64, 64, 4
        $region36: #{tpu_custom_call.1} parent=31 // pred_fallthru
          _
      $region32: #{tpu_custom_call.1} parent=5 // pred_fallthru
        _
      %p226 = scmp.le.s32.totalorder 1, %s18
      %p227 = scmp.lt.s32.totalorder %s18, 3
      %p228 = pnand %p226, %p227
      %p229 = pneg %p228
      // Predicated region
      $region37: #{tpu_custom_call.1} parent=5 // pred_check
        _
      $region38: #{tpu_custom_call.1} parent=5 // pred_check_branch
        %231 = sbr.rel (%p228) target = $region40
      $region39: #{tpu_custom_call.1} parent=5 // pred_region
        %s232 = ssub.s32 %s18, 1
        %s233 = sand.u32 %s31, 1
        %s234 = scalar_lea.sflag [#allocation3], %s233
        %s235 = sand.u32 %s31, 1
        %s236 = smul.addr %s235, 64
        %s237 = scalar_lea.vmem [#allocation2], %s236
        // Predicated region
        $region41: #{tpu_custom_call.1} parent=39 // pred_check
          %p238 = pneg %p44
        $region42: #{tpu_custom_call.1} parent=39 // pred_check_branch
          %240 = sbr.rel (%p238) target = $region44
        $region43: #{tpu_custom_call.1} parent=39 // pred_region
          %241 = dma.done %s234, 1024
        $region44: #{tpu_custom_call.1} parent=39 // pred_fallthru
          _
        // Predicated region
        $region45: #{tpu_custom_call.1} parent=39 // pred_check
          %p242 = pneg %p65
        $region46: #{tpu_custom_call.1} parent=39 // pred_check_branch
          %244 = sbr.rel (%p242) target = $region48
        $region47: #{tpu_custom_call.1} parent=39 // pred_region
          %245 = dma.done [#allocation6], 1024
        $region48: #{tpu_custom_call.1} parent=39 // pred_fallthru
          _
        // Predicated region
        $region49: #{tpu_custom_call.1} parent=39 // pred_check
          %p246 = pneg %p107
        $region50: #{tpu_custom_call.1} parent=39 // pred_check_branch
          %248 = sbr.rel (%p246) target = $region52
        $region51: #{tpu_custom_call.1} parent=39 // pred_region
          %249 = dma.done [#allocation6], 1024
        $region52: #{tpu_custom_call.1} parent=39 // pred_fallthru
          _
        %s250 = sand.u32 %s31, 1
        %s251 = scalar_lea.sflag [#allocation3], %s250
        %s252 = sand.u32 %s31, 1
        %s253 = smul.addr %s252, 64
        %s254 = scalar_lea.vmem [#allocation2], %s253
        %p255 = pneg %p44
        %p256 = pneg %p41
        %p257 = pneg %p65
        %p258 = pneg %p62
        %p259 = pneg %p86
        %p260 = pneg %p83
        %p261 = pneg %p107
        %p262 = pneg %p104
        %p263 = pneg %p128
        %p264 = pneg %p125
        %p265 = pneg %p154
        %p266 = pneg %p151
        %s267 = sand.u32 %s141, 1
        %s268 = scalar_lea.sflag [#allocation4], %s267
        %s269 = sand.u32 %s141, 1
        %s270 = smul.addr %s269, 128
        %s271 = scalar_lea.vmem [#allocation8], %s270
        %s272 = smul.u32 16, %s23
        %s273 = smul.u32 16, %s23
        %v275 = vld [vmem:[%s237] sm:$0xf]
        %v276 = vld [vmem:[%s237 + $0x4] sm:$0xf]
        %v277 = vld [vmem:[%s237 + $0x8] sm:$0xf]
        %v278 = vld [vmem:[%s237 + $0xc] sm:$0xf]
        %v279 = vld [vmem:[%s237 + $0x10] sm:$0xf]
        %v280 = vld [vmem:[%s237 + $0x14] sm:$0xf]
        %v281 = vld [vmem:[%s237 + $0x18] sm:$0xf]
        %v282 = vld [vmem:[%s237 + $0x1c] sm:$0xf]
        %v283 = vld [vmem:[%s237 + $0x20] sm:$0xf]
        %v284 = vld [vmem:[%s237 + $0x24] sm:$0xf]
        %v285 = vld [vmem:[%s237 + $0x28] sm:$0xf]
        %v286 = vld [vmem:[%s237 + $0x2c] sm:$0xf]
        %v287 = vld [vmem:[%s237 + $0x30] sm:$0xf]
        %v288 = vld [vmem:[%s237 + $0x34] sm:$0xf]
        %v289 = vld [vmem:[%s237 + $0x38] sm:$0xf]
        %v290 = vld [vmem:[%s237 + $0x3c] sm:$0xf]
        %v291 = vld [vmem:[#allocation5] sm:$0xf]
        %v292 = vld [vmem:[#allocation5 + $0x4] sm:$0xf]
        %v293 = vld [vmem:[#allocation5 + $0x8] sm:$0xf]
        %v294 = vld [vmem:[#allocation5 + $0xc] sm:$0xf]
        %v295 = vld [vmem:[#allocation5 + $0x10] sm:$0xf]
        %v296 = vld [vmem:[#allocation5 + $0x14] sm:$0xf]
        %v297 = vld [vmem:[#allocation5 + $0x18] sm:$0xf]
        %v298 = vld [vmem:[#allocation5 + $0x1c] sm:$0xf]
        %v299 = vld [vmem:[#allocation5 + $0x20] sm:$0xf]
        %v300 = vld [vmem:[#allocation5 + $0x24] sm:$0xf]
        %v301 = vld [vmem:[#allocation5 + $0x28] sm:$0xf]
        %v302 = vld [vmem:[#allocation5 + $0x2c] sm:$0xf]
        %v303 = vld [vmem:[#allocation5 + $0x30] sm:$0xf]
        %v304 = vld [vmem:[#allocation5 + $0x34] sm:$0xf]
        %v305 = vld [vmem:[#allocation5 + $0x38] sm:$0xf]
        %v306 = vld [vmem:[#allocation5 + $0x3c] sm:$0xf]
        %v307 = vld [vmem:[%s2] sm:$0x1]
        %v309 = vlaneseq
        %v310 = vshrl.u32 %v309, 7
        %v311 = vsub.s32 0, %v310
        %v312 = vrot.slane %v307, %v311
        %v330 = vunpack.c.l.b16 %v275
        %v331 = vunpack.c.l.b16 %v276
        %v332 = vunpack.c.l.b16 %v277
        %v333 = vunpack.c.l.b16 %v278
        %v334 = vunpack.c.l.b16 %v279
        %v335 = vunpack.c.l.b16 %v280
        %v336 = vunpack.c.l.b16 %v281
        %v337 = vunpack.c.l.b16 %v282
        %v338 = vunpack.c.l.b16 %v283
        %v339 = vunpack.c.l.b16 %v284
        %v340 = vunpack.c.l.b16 %v285
        %v341 = vunpack.c.l.b16 %v286
        %v342 = vunpack.c.l.b16 %v287
        %v343 = vunpack.c.l.b16 %v288
        %v344 = vunpack.c.l.b16 %v289
        %v345 = vunpack.c.l.b16 %v290
        %v346 = vpack.c.b16 %v331, %v330
        %v347 = vpack.c.b16 %v333, %v332
        %v348 = vpack.c.b16 %v335, %v334
        %v349 = vpack.c.b16 %v337, %v336
        %v350 = vpack.c.b16 %v339, %v338
        %v351 = vpack.c.b16 %v341, %v340
        %v352 = vpack.c.b16 %v343, %v342
        %v353 = vpack.c.b16 %v345, %v344
        %v378 = vunpack.c.l.b16 %v291
        %v379 = vunpack.c.l.b16 %v292
        %v380 = vunpack.c.l.b16 %v293
        %v381 = vunpack.c.l.b16 %v294
        %v382 = vunpack.c.l.b16 %v295
        %v383 = vunpack.c.l.b16 %v296
        %v384 = vunpack.c.l.b16 %v297
        %v385 = vunpack.c.l.b16 %v298
        %v386 = vunpack.c.l.b16 %v299
        %v387 = vunpack.c.l.b16 %v300
        %v388 = vunpack.c.l.b16 %v301
        %v389 = vunpack.c.l.b16 %v302
        %v390 = vunpack.c.l.b16 %v303
        %v391 = vunpack.c.l.b16 %v304
        %v392 = vunpack.c.l.b16 %v305
        %v393 = vunpack.c.l.b16 %v306
        %v394 = vpack.c.b16 %v379, %v378
        %v395 = vpack.c.b16 %v381, %v380
        %v396 = vpack.c.b16 %v383, %v382
        %v397 = vpack.c.b16 %v385, %v384
        %v398 = vpack.c.b16 %v387, %v386
        %v399 = vpack.c.b16 %v389, %v388
        %v400 = vpack.c.b16 %v391, %v390
        %v401 = vpack.c.b16 %v393, %v392
        %410 = vmatprep.subr.bf16.mxu0 0
        %411 = vmatpush1.bf16.msra.mxu0 %v401
        %412 = vmatprep.subr.bf16.mxu0 0
        %413 = vmatpush1.bf16.msra.mxu0 %v400
        %414 = vmatprep.subr.bf16.mxu0 0
        %415 = vmatpush1.bf16.msra.mxu0 %v399
        %416 = vmatprep.subr.bf16.mxu0 0
        %417 = vmatpush1.bf16.msra.mxu0 %v398
        %418 = vmatprep.subr.bf16.mxu0 0
        %419 = vmatpush1.bf16.msra.mxu0 %v397
        %420 = vmatprep.subr.bf16.mxu0 0
        %421 = vmatpush1.bf16.msra.mxu0 %v396
        %422 = vmatprep.subr.bf16.mxu0 0
        %423 = vmatpush1.bf16.msra.mxu0 %v395
        %424 = vmatprep.subr.bf16.mxu0 0
        %425 = vmatpush1.bf16.msra.mxu0 %v394
        %426 = vmatprep.subr.bf16.mxu0 0
        %427 = vmatpush2.bf16.msra.mxu0 0
        %428 = vmatprep.subr.bf16.mxu0 0
        %429 = vmatpush2.bf16.msra.mxu0 0
        %430 = vmatprep.subr.bf16.mxu0 0
        %431 = vmatpush2.bf16.msra.mxu0 0
        %432 = vmatprep.subr.bf16.mxu0 0
        %433 = vmatpush2.bf16.msra.mxu0 0
        %434 = vmatprep.subr.bf16.mxu0 0
        %435 = vmatpush2.bf16.msra.mxu0 0
        %436 = vmatprep.subr.bf16.mxu0 0
        %437 = vmatpush2.bf16.msra.mxu0 0
        %438 = vmatprep.subr.bf16.mxu0 0
        %439 = vmatpush2.bf16.msra.mxu0 0
        %440 = vmatprep.subr.bf16.mxu0 0
        %441 = vmatpush2.bf16.msra.mxu0 0
        %442 = vmatprep.mubr.bf16.mxu0 0
        %443 = vmatmul.mubr.bf16.gmra.mxu0 %v346
        %v444 = vpop.f32.mrf.mxu0
        %v445 = vadd.f32 %v312, %v444
        %v446 = vpop.f32.mrf.mxu0
        %v447 = vpop.f32.mrf.mxu0
        %v448 = vadd.f32 %v312, %v447
        %v449 = vpop.f32.mrf.mxu0
        %450 = vmatprep.mubr.bf16.mxu0 0
        %451 = vmatmul.mubr.bf16.gmra.mxu0 %v347
        %v452 = vpop.f32.mrf.mxu0
        %v453 = vadd.f32 %v312, %v452
        %v454 = vpop.f32.mrf.mxu0
        %v455 = vpop.f32.mrf.mxu0
        %v456 = vadd.f32 %v312, %v455
        %v457 = vpop.f32.mrf.mxu0
        %458 = vmatprep.mubr.bf16.mxu0 0
        %459 = vmatmul.mubr.bf16.gmra.mxu0 %v348
        %v460 = vpop.f32.mrf.mxu0
        %v461 = vadd.f32 %v312, %v460
        %v462 = vpop.f32.mrf.mxu0
        %v463 = vpop.f32.mrf.mxu0
        %v464 = vadd.f32 %v312, %v463
        %v465 = vpop.f32.mrf.mxu0
        %466 = vmatprep.mubr.bf16.mxu0 0
        %467 = vmatmul.mubr.bf16.gmra.mxu0 %v349
        %v468 = vpop.f32.mrf.mxu0
        %v469 = vadd.f32 %v312, %v468
        %v470 = vpop.f32.mrf.mxu0
        %v471 = vpop.f32.mrf.mxu0
        %v472 = vadd.f32 %v312, %v471
        %v473 = vpop.f32.mrf.mxu0
        %474 = vmatprep.mubr.bf16.mxu0 0
        %475 = vmatmul.mubr.bf16.gmra.mxu0 %v350
        %v476 = vpop.f32.mrf.mxu0
        %v477 = vadd.f32 %v312, %v476
        %v478 = vpop.f32.mrf.mxu0
        %v479 = vpop.f32.mrf.mxu0
        %v480 = vadd.f32 %v312, %v479
        %v481 = vpop.f32.mrf.mxu0
        %482 = vmatprep.mubr.bf16.mxu0 0
        %483 = vmatmul.mubr.bf16.gmra.mxu0 %v351
        %v484 = vpop.f32.mrf.mxu0
        %v485 = vadd.f32 %v312, %v484
        %v486 = vpop.f32.mrf.mxu0
        %v487 = vpop.f32.mrf.mxu0
        %v488 = vadd.f32 %v312, %v487
        %v489 = vpop.f32.mrf.mxu0
        %490 = vmatprep.mubr.bf16.mxu0 0
        %491 = vmatmul.mubr.bf16.gmra.mxu0 %v352
        %v492 = vpop.f32.mrf.mxu0
        %v493 = vadd.f32 %v312, %v492
        %v494 = vpop.f32.mrf.mxu0
        %v495 = vpop.f32.mrf.mxu0
        %v496 = vadd.f32 %v312, %v495
        %v497 = vpop.f32.mrf.mxu0
        %498 = vmatprep.mubr.bf16.mxu0 0
        %499 = vmatmul.mubr.bf16.gmra.mxu0 %v353
        %v500 = vpop.f32.mrf.mxu0
        %v501 = vadd.f32 %v312, %v500
        %v502 = vpop.f32.mrf.mxu0
        %v503 = vpop.f32.mrf.mxu0
        %v504 = vadd.f32 %v312, %v503
        %v505 = vpop.f32.mrf.mxu0
        %506 = vdwg.mxu0
        %v507 = vmax.f32 %v445, 0.0
        %v508 = vmax.f32 %v448, 0.0
        %v509 = vmax.f32 %v453, 0.0
        %v510 = vmax.f32 %v456, 0.0
        %v511 = vmax.f32 %v461, 0.0
        %v512 = vmax.f32 %v464, 0.0
        %v513 = vmax.f32 %v469, 0.0
        %v514 = vmax.f32 %v472, 0.0
        %v515 = vmax.f32 %v477, 0.0
        %v516 = vmax.f32 %v480, 0.0
        %v517 = vmax.f32 %v485, 0.0
        %v518 = vmax.f32 %v488, 0.0
        %v519 = vmax.f32 %v493, 0.0
        %v520 = vmax.f32 %v496, 0.0
        %v521 = vmax.f32 %v501, 0.0
        %v522 = vmax.f32 %v504, 0.0
        %v523 = vpack.c.bf16 %v508, %v507
        %v524 = vpack.c.bf16 %v510, %v509
        %v525 = vpack.c.bf16 %v512, %v511
        %v526 = vpack.c.bf16 %v514, %v513
        %v527 = vpack.c.bf16 %v516, %v515
        %v528 = vpack.c.bf16 %v518, %v517
        %v529 = vpack.c.bf16 %v520, %v519
        %v530 = vpack.c.bf16 %v522, %v521
        %v531 = vld [vmem:[#allocation7] sm:$0xf]
        %v532 = vld [vmem:[#allocation7 + $0x4] sm:$0xf]
        %v533 = vld [vmem:[#allocation7 + $0x8] sm:$0xf]
        %v534 = vld [vmem:[#allocation7 + $0xc] sm:$0xf]
        %v535 = vld [vmem:[#allocation7 + $0x10] sm:$0xf]
        %v536 = vld [vmem:[#allocation7 + $0x14] sm:$0xf]
        %v537 = vld [vmem:[#allocation7 + $0x18] sm:$0xf]
        %v538 = vld [vmem:[#allocation7 + $0x1c] sm:$0xf]
        %v539 = vld [vmem:[#allocation7 + $0x20] sm:$0xf]
        %v540 = vld [vmem:[#allocation7 + $0x24] sm:$0xf]
        %v541 = vld [vmem:[#allocation7 + $0x28] sm:$0xf]
        %v542 = vld [vmem:[#allocation7 + $0x2c] sm:$0xf]
        %v543 = vld [vmem:[#allocation7 + $0x30] sm:$0xf]
        %v544 = vld [vmem:[#allocation7 + $0x34] sm:$0xf]
        %v545 = vld [vmem:[#allocation7 + $0x38] sm:$0xf]
        %v546 = vld [vmem:[#allocation7 + $0x3c] sm:$0xf]
        %v547 = vld [vmem:[%s4] sm:$0x1]
        %v549 = vlaneseq
        %v550 = vshrl.u32 %v549, 7
        %v551 = vsub.s32 0, %v550
        %v552 = vrot.slane %v547, %v551
        %v570 = vunpack.c.l.b16 %v531
        %v571 = vunpack.c.l.b16 %v532
        %v572 = vunpack.c.l.b16 %v533
        %v573 = vunpack.c.l.b16 %v534
        %v574 = vunpack.c.l.b16 %v535
        %v575 = vunpack.c.l.b16 %v536
        %v576 = vunpack.c.l.b16 %v537
        %v577 = vunpack.c.l.b16 %v538
        %v578 = vunpack.c.l.b16 %v539
        %v579 = vunpack.c.l.b16 %v540
        %v580 = vunpack.c.l.b16 %v541
        %v581 = vunpack.c.l.b16 %v542
        %v582 = vunpack.c.l.b16 %v543
        %v583 = vunpack.c.l.b16 %v544
        %v584 = vunpack.c.l.b16 %v545
        %v585 = vunpack.c.l.b16 %v546
        %v586 = vpack.c.b16 %v571, %v570
        %v587 = vpack.c.b16 %v573, %v572
        %v588 = vpack.c.b16 %v575, %v574
        %v589 = vpack.c.b16 %v577, %v576
        %v590 = vpack.c.b16 %v579, %v578
        %v591 = vpack.c.b16 %v581, %v580
        %v592 = vpack.c.b16 %v583, %v582
        %v593 = vpack.c.b16 %v585, %v584
        %602 = vmatprep.subr.bf16.mxu0 0
        %603 = vmatpush1.bf16.msra.mxu0 %v593
        %604 = vmatprep.subr.bf16.mxu0 0
        %605 = vmatpush1.bf16.msra.mxu0 %v592
        %606 = vmatprep.subr.bf16.mxu0 0
        %607 = vmatpush1.bf16.msra.mxu0 %v591
        %608 = vmatprep.subr.bf16.mxu0 0
        %609 = vmatpush1.bf16.msra.mxu0 %v590
        %610 = vmatprep.subr.bf16.mxu0 0
        %611 = vmatpush1.bf16.msra.mxu0 %v589
        %612 = vmatprep.subr.bf16.mxu0 0
        %613 = vmatpush1.bf16.msra.mxu0 %v588
        %614 = vmatprep.subr.bf16.mxu0 0
        %615 = vmatpush1.bf16.msra.mxu0 %v587
        %616 = vmatprep.subr.bf16.mxu0 0
        %617 = vmatpush1.bf16.msra.mxu0 %v586
        %618 = vmatprep.subr.bf16.mxu0 0
        %619 = vmatpush2.bf16.msra.mxu0 0
        %620 = vmatprep.subr.bf16.mxu0 0
        %621 = vmatpush2.bf16.msra.mxu0 0
        %622 = vmatprep.subr.bf16.mxu0 0
        %623 = vmatpush2.bf16.msra.mxu0 0
        %624 = vmatprep.subr.bf16.mxu0 0
        %625 = vmatpush2.bf16.msra.mxu0 0
        %626 = vmatprep.subr.bf16.mxu0 0
        %627 = vmatpush2.bf16.msra.mxu0 0
        %628 = vmatprep.subr.bf16.mxu0 0
        %629 = vmatpush2.bf16.msra.mxu0 0
        %630 = vmatprep.subr.bf16.mxu0 0
        %631 = vmatpush2.bf16.msra.mxu0 0
        %632 = vmatprep.subr.bf16.mxu0 0
        %633 = vmatpush2.bf16.msra.mxu0 0
        %634 = vmatprep.mubr.bf16.mxu0 0
        %635 = vmatmul.mubr.bf16.gmra.mxu0 %v523
        %v636 = vpop.f32.mrf.mxu0
        %v637 = vadd.f32 %v552, %v636
        %v638 = vpop.f32.mrf.mxu0
        %v639 = vpop.f32.mrf.mxu0
        %v640 = vadd.f32 %v552, %v639
        %v641 = vpop.f32.mrf.mxu0
        %642 = vmatprep.mubr.bf16.mxu0 0
        %643 = vmatmul.mubr.bf16.gmra.mxu0 %v524
        %v644 = vpop.f32.mrf.mxu0
        %v645 = vadd.f32 %v552, %v644
        %v646 = vpop.f32.mrf.mxu0
        %v647 = vpop.f32.mrf.mxu0
        %v648 = vadd.f32 %v552, %v647
        %v649 = vpop.f32.mrf.mxu0
        %650 = vmatprep.mubr.bf16.mxu0 0
        %651 = vmatmul.mubr.bf16.gmra.mxu0 %v525
        %v652 = vpop.f32.mrf.mxu0
        %v653 = vadd.f32 %v552, %v652
        %v654 = vpop.f32.mrf.mxu0
        %v655 = vpop.f32.mrf.mxu0
        %v656 = vadd.f32 %v552, %v655
        %v657 = vpop.f32.mrf.mxu0
        %658 = vmatprep.mubr.bf16.mxu0 0
        %659 = vmatmul.mubr.bf16.gmra.mxu0 %v526
        %v660 = vpop.f32.mrf.mxu0
        %v661 = vadd.f32 %v552, %v660
        %v662 = vpop.f32.mrf.mxu0
        %v663 = vpop.f32.mrf.mxu0
        %v664 = vadd.f32 %v552, %v663
        %v665 = vpop.f32.mrf.mxu0
        %666 = vmatprep.mubr.bf16.mxu0 0
        %667 = vmatmul.mubr.bf16.gmra.mxu0 %v527
        %v668 = vpop.f32.mrf.mxu0
        %v669 = vadd.f32 %v552, %v668
        %v670 = vpop.f32.mrf.mxu0
        %v671 = vpop.f32.mrf.mxu0
        %v672 = vadd.f32 %v552, %v671
        %v673 = vpop.f32.mrf.mxu0
        %674 = vmatprep.mubr.bf16.mxu0 0
        %675 = vmatmul.mubr.bf16.gmra.mxu0 %v528
        %v676 = vpop.f32.mrf.mxu0
        %v677 = vadd.f32 %v552, %v676
        %v678 = vpop.f32.mrf.mxu0
        %v679 = vpop.f32.mrf.mxu0
        %v680 = vadd.f32 %v552, %v679
        %v681 = vpop.f32.mrf.mxu0
        %682 = vmatprep.mubr.bf16.mxu0 0
        %683 = vmatmul.mubr.bf16.gmra.mxu0 %v529
        %v684 = vpop.f32.mrf.mxu0
        %v685 = vadd.f32 %v552, %v684
        %v686 = vpop.f32.mrf.mxu0
        %v687 = vpop.f32.mrf.mxu0
        %v688 = vadd.f32 %v552, %v687
        %v689 = vpop.f32.mrf.mxu0
        %690 = vmatprep.mubr.bf16.mxu0 0
        %691 = vmatmul.mubr.bf16.gmra.mxu0 %v530
        %v692 = vpop.f32.mrf.mxu0
        %v693 = vadd.f32 %v552, %v692
        %v694 = vpop.f32.mrf.mxu0
        %v695 = vpop.f32.mrf.mxu0
        %v696 = vadd.f32 %v552, %v695
        %v697 = vpop.f32.mrf.mxu0
        %698 = vdwg.mxu0
        %v699 = vtanh.pop %v637
        %v700 = vtanh.pop %v640
        %v701 = vtanh.pop %v645
        %v702 = vtanh.pop %v648
        %v703 = vtanh.pop %v653
        %v704 = vtanh.pop %v656
        %v705 = vtanh.pop %v661
        %v706 = vtanh.pop %v664
        %v707 = vtanh.pop %v669
        %v708 = vtanh.pop %v672
        %v709 = vtanh.pop %v677
        %v710 = vtanh.pop %v680
        %v711 = vtanh.pop %v685
        %v712 = vtanh.pop %v688
        %v713 = vtanh.pop %v693
        %v714 = vtanh.pop %v696
        %715 = vst [vmem:[%s271] sm:$0xff] %v699
        %716 = vst [vmem:[%s271 + $0x8] sm:$0xff] %v700
        %717 = vst [vmem:[%s271 + $0x10] sm:$0xff] %v701
        %718 = vst [vmem:[%s271 + $0x18] sm:$0xff] %v702
        %719 = vst [vmem:[%s271 + $0x20] sm:$0xff] %v703
        %720 = vst [vmem:[%s271 + $0x28] sm:$0xff] %v704
        %721 = vst [vmem:[%s271 + $0x30] sm:$0xff] %v705
        %722 = vst [vmem:[%s271 + $0x38] sm:$0xff] %v706
        %723 = vst [vmem:[%s271 + $0x40] sm:$0xff] %v707
        %724 = vst [vmem:[%s271 + $0x48] sm:$0xff] %v708
        %725 = vst [vmem:[%s271 + $0x50] sm:$0xff] %v709
        %726 = vst [vmem:[%s271 + $0x58] sm:$0xff] %v710
        %727 = vst [vmem:[%s271 + $0x60] sm:$0xff] %v711
        %728 = vst [vmem:[%s271 + $0x68] sm:$0xff] %v712
        %729 = vst [vmem:[%s271 + $0x70] sm:$0xff] %v713
        %730 = vst [vmem:[%s271 + $0x78] sm:$0xff] %v714
        %s731 = sand.u32 %s141, 1
        %s732 = scalar_lea.sflag [#allocation4], %s731
        %s733 = sand.u32 %s141, 1
        %s734 = smul.addr %s733, 128
        %s735 = scalar_lea.vmem [#allocation8], %s734
        // Predicated region
        $region53: #{tpu_custom_call.1} parent=39 // pred_check
          %p736 = pneg %p151
        $region54: #{tpu_custom_call.1} parent=39 // pred_check_branch
          %738 = sbr.rel (%p736) target = $region56
        $region55: #{tpu_custom_call.1} parent=39 // pred_region
          %s739 = smul.u32 16, %s23
          %s741 = ssub.s32 2048, 2048
          %742 = vsyncadd %s732, %s741
          %s743 = smul.addr %s739, 128
          %s744 = scalar_lea.hbm %s5, %s743
          %s745 = sshll.u32 %s735, 4
          %s746 = int_to_ptr.vmem [resolvable:$true] %s745
          %751 = dma.vmem_to_hbm [thread:$0]  %s746, 2048, %s744, %s732, 128, 128, 8
        $region56: #{tpu_custom_call.1} parent=39 // pred_fallthru
          _
      $region40: #{tpu_custom_call.1} parent=5 // pred_fallthru
        _
      %p752 = scmp.le.s32.totalorder 2, %s18
      // Predicated region
      $region57: #{tpu_custom_call.1} parent=5 // pred_check
        %p753 = pneg %p752
      $region58: #{tpu_custom_call.1} parent=5 // pred_check_branch
        %755 = sbr.rel (%p753) target = $region60
      $region59: #{tpu_custom_call.1} parent=5 // pred_region
        %s756 = ssub.s32 %s18, 2
        // Predicated region
        $region61: #{tpu_custom_call.1} parent=59 // pred_check
          %p757 = pneg %p157
        $region62: #{tpu_custom_call.1} parent=59 // pred_check_branch
          %759 = sbr.rel (%p757) target = $region64
        $region63: #{tpu_custom_call.1} parent=59 // pred_region
          %s760 = sand.u32 %s142, 1
          %s761 = scalar_lea.sflag [#allocation4], %s760
          %s762 = sand.u32 %s142, 1
          %s763 = smul.addr %s762, 128
          %s764 = scalar_lea.vmem [#allocation8], %s763
          %765 = dma.done %s761, 2048
        $region64: #{tpu_custom_call.1} parent=59 // pred_fallthru
          _
      $region60: #{tpu_custom_call.1} parent=5 // pred_fallthru
        _
    $region6: #{tpu_custom_call.1} parent=1 // loop_footer
      %s22 = sadd.s32 1, %s18
    $region7: #{tpu_custom_call.1} parent=1 // loop_footer_branch
      %17 = sbr.rel target = $region3
    $region8: #{tpu_custom_call.1} parent=1 // loop_exit
      _
    %766 = vsyncpa [#allocation3], 1
    %s767 = scalar_lea.sflag [#allocation3], 1
    %768 = vsyncpa %s767, 1
    %769 = vsyncpa [#allocation6], 1
    %770 = vsyncpa [#allocation4], 1
    %s771 = scalar_lea.sflag [#allocation4], 1
    %772 = vsyncpa %s771, 1

</llo_original>
